<compile_context>
chip_gen: v7x
topology: tpu7x:2x2x1
jax: 0.10.0
libtpu: 0.0.40
codegen_flags: <defaults>
</compile_context>

<pallas_src>
import functools

import jax
import jax.numpy as jnp
from jax.experimental import pallas as pl
from jax.experimental.pallas import tpu as pltpu


def _cat_add_relu_kernel(x_ref, o_ref):
    # x_ref: (2, 2) VMEM tile (full array), o_ref: (2, 4) VMEM tile (full array)
    v = jnp.maximum(x_ref[...] + 1.0, 0.0)        # relu(x + 1), computed once
    o_ref[...] = jnp.concatenate([v, v], axis=1)  # single full-tile store


@functools.partial(jax.jit, static_argnames=())
def model_forward(x1: jax.Array) -> jax.Array:
    rows, cols = x1.shape  # (2, 2)
    out_shape = jax.ShapeDtypeStruct((rows, 2 * cols), x1.dtype)
    in_bytes = rows * cols * x1.dtype.itemsize
    out_bytes = rows * 2 * cols * x1.dtype.itemsize
    return pl.pallas_call(
        _cat_add_relu_kernel,
        out_shape=out_shape,
        # Full-array blocks (block shape equals array dims, so the (8,128)
        # divisibility rule does not apply). Explicit VMEM residency.
        in_specs=[pl.BlockSpec((rows, cols), lambda: (0, 0),
                               memory_space=pltpu.VMEM)],
        out_specs=pl.BlockSpec((rows, 2 * cols), lambda: (0, 0),
                               memory_space=pltpu.VMEM),
        cost_estimate=pl.CostEstimate(
            flops=2 * rows * 2 * cols,           # add + relu per output elem
            bytes_accessed=in_bytes + out_bytes,  # 16 + 32 = 48
            transcendentals=0,
        ),
    )(x1)


def init_unused_linear_params(key):
    # torch.nn.Linear(2, 2): weight (2, 2), bias (2,). Unused in forward,
    # but initialized deterministically for parity with the module __init__.
    kw, kb = jax.random.split(key)
    bound = 1.0 / jnp.sqrt(2.0)
    weight = jax.random.uniform(kw, (2, 2), jnp.float32, -bound, bound)
    bias = jax.random.uniform(kb, (2,), jnp.float32, -bound, bound)
    return weight, bias


if __name__ == "__main__":
    key = jax.random.PRNGKey(0)
    k_x, k_params = jax.random.split(key)

    x1 = jax.random.normal(k_x, (2, 2), dtype=jnp.float32)
    _w, _b = init_unused_linear_params(k_params)  # unused, mirrors nn.Linear(2, 2)

    out = model_forward(x1)
    jax.block_until_ready(out)

    # Reference check in plain JAX.
    ref = jnp.maximum(jnp.concatenate([x1, x1], axis=1) + 1.0, 0.0)
    assert out.shape == (2, 4)
    assert jnp.allclose(out, ref, atol=1e-6), "mismatch vs reference"

    print("KERNEL_OK")
</pallas_src>

<mosaic_0001>
module attributes {stable_mosaic.version = 11 : i64} {
  func.func @_cat_add_relu_kernel(%arg0: memref<2x2xf32, #tpu.memory_space<vmem>>, %arg1: memref<2x4xf32, #tpu.memory_space<vmem>>) attributes {dimension_semantics = [], scalar_prefetch = 0 : i64, scratch_operands = 0 : i64, tpu.core_type = #tpu.core_type<tc>} {
    %c0 = arith.constant 0 : index
    %c0_0 = arith.constant 0 : index
    %0 = vector.load %arg0[%c0, %c0_0] : memref<2x2xf32, #tpu.memory_space<vmem>>, vector<2x2xf32>
    %cst = arith.constant 1.000000e+00 : f32
    %1 = vector.broadcast %cst : f32 to vector<2x2xf32>
    %2 = arith.addf %0, %1 : vector<2x2xf32>
    %cst_1 = arith.constant 0.000000e+00 : f32
    %3 = vector.broadcast %cst_1 : f32 to vector<2x2xf32>
    %4 = arith.maximumf %2, %3 : vector<2x2xf32>
    %5 = tpu.concatenate %4, %4 in 1 : vector<2x2xf32>, vector<2x2xf32> -> vector<2x4xf32>
    %c0_2 = arith.constant 0 : index
    %c0_3 = arith.constant 0 : index
    %6 = vector.load %arg1[%c0_2, %c0_3] : memref<2x4xf32, #tpu.memory_space<vmem>>, vector<2x4xf32>
    tpu.vector_store %arg1[%c0_2, %c0_3], %5 {strides = array<i32>} : memref<2x4xf32, #tpu.memory_space<vmem>>, vector<2x4xf32>,
    return
  }
}

</mosaic_0001>

<llo_original>
// kernel: model_forward.1
$region0: #{model_forward.1}
  #allocation0 [shape = 'u32[]', space=smem, size = 0x4, offset = 0x4, fixed_abs, tag = 'smem constant byte address 0x4 - core index']
  #allocation1 [shape = 'u32[144,128]{1,0:T(1,128)}', space=vmem, size = 0x12000, scoped, tag = 'internal scratch']
  %s0 = inlined_call_operand.hbm [shape: f32[2,2], index: 0, kind: input, shape index: {}]
  %s1 = inlined_call_operand.hbm [shape: f32[2,4], index: 1, kind: output, shape index: {}]
  %s2 = sld [smem:[#allocation0]]
  $region18: #{model_forward.1} parent=0
    _
  %s4 = ssub.s32 1, %s2
  %s5 = scalar_select 0, %s4, %s2
  $region1: #{model_forward.1} parent=0
    #allocation2 [shape = 'u8[1024]{0}', space=vmem, size = 0x400, scoped, tag = 'input window, operand 0, single buffered']
    #allocation3 [shape = 's32[1]{0}', space=sflag, size = 0x4, scoped, tag = 'scoped memory for model_forward.1']
    #allocation4 [shape = 's32[1]{0}', space=sflag, size = 0x4, scoped, tag = 'scoped memory for model_forward.1']
    #allocation5 [shape = 'u8[1024]{0}', space=vmem, size = 0x400, scoped, tag = 'output window, operand 0, single buffered']
    %6 = vsyncpa [#allocation3], 0
    %7 = vsyncpa [#allocation4], 0
    // Predicated region
    $region2: #{model_forward.1} parent=1 // pred_check
      _
    $region3: #{model_forward.1} parent=1 // pred_check_branch
      %9 = sbr.rel (0) target = $region5
    $region4: #{model_forward.1} parent=1 // pred_region
      %s11 = ssub.s32 32, 32
      %12 = vsyncadd [#allocation3], %s11
      %s14 = sshll.u32 [#allocation2], 4
      %s15 = int_to_ptr.vmem [resolvable:$true] %s14
      %17 = dma.hbm_to_vmem [thread:$0]  %s0, 32, %s15, [#allocation3]
    $region5: #{model_forward.1} parent=1 // pred_fallthru
      _
    // Predicated region
    $region6: #{model_forward.1} parent=1 // pred_check
      _
    $region7: #{model_forward.1} parent=1 // pred_check_branch
      %19 = sbr.rel (0) target = $region9
    $region8: #{model_forward.1} parent=1 // pred_region
      %20 = dma.done [#allocation3], 32
    $region9: #{model_forward.1} parent=1 // pred_fallthru
      _
    %v21 = vld [vmem:[#allocation2] sm:$0x3]
    %v22 = vadd.f32 %v21, 1.0
    %v23 = vmax.f32 %v22, 0.0
    %25 = vrot.lane.b32.xlu0 %v23, 2
    %v26 = vpop.permute.xlu0 %25
    %vm28 = vcmask 15360
    %v29 = vsel %vm28, %v23, %v26
    %vm30 = vcmask 25600
    %31 = vst.msk [vmem:[#allocation5] sm:$0x3] %vm30, %v29
    // Predicated region
    $region10: #{model_forward.1} parent=1 // pred_check
      _
    $region11: #{model_forward.1} parent=1 // pred_check_branch
      %33 = sbr.rel (0) target = $region13
    $region12: #{model_forward.1} parent=1 // pred_region
      %s35 = ssub.s32 32, 32
      %36 = vsyncadd [#allocation4], %s35
      %s38 = sshll.u32 [#allocation5], 4
      %s39 = int_to_ptr.vmem [resolvable:$true] %s38
      %41 = dma.vmem_to_hbm [thread:$0]  %s39, 32, %s1, [#allocation4]
    $region13: #{model_forward.1} parent=1 // pred_fallthru
      _
    // Predicated region
    $region14: #{model_forward.1} parent=1 // pred_check
      _
    $region15: #{model_forward.1} parent=1 // pred_check_branch
      %43 = sbr.rel (0) target = $region17
    $region16: #{model_forward.1} parent=1 // pred_region
      %44 = dma.done [#allocation4], 32
    $region17: #{model_forward.1} parent=1 // pred_fallthru
      _
    %45 = vsyncpa [#allocation3], 1
    %46 = vsyncpa [#allocation4], 1

</llo_original>
